<compile_context>
chip_gen: v7x
topology: tpu7x:2x2x1
jax: 0.10.0
libtpu: 0.0.40
codegen_flags: <defaults>
</compile_context>

<pallas_src>
import functools

import jax
import jax.numpy as jnp
from jax.experimental import pallas as pl
from jax.experimental.pallas import tpu as pltpu

_VMEM_LIMIT_BYTES = 48 * 1024 * 1024   # scoped limit requested from Mosaic
_BLOCK_BUDGET = 30 * 1024 * 1024       # budget for our double-buffered blocks


def _round_up(x, m):
    return -(-x // m) * m


def _cdiv(a, b):
    return -(-a // b)


def _choose_tiling(B, D, itemsize, block_budget=_BLOCK_BUDGET):
    """Returns (B_pad, tm, tn, D_pad, tk, num_k)."""
    budget = block_budget - (1 << 20)   # headroom for out / diag blocks etc.
    if B <= 256:
        # Tiny problem: one (B_pad, B_pad) tile.
        B_pad = _round_up(B, 8)
        tm = tn = B_pad
    else:
        B_pad = _round_up(B, 256)
        tn = 256                        # MXU-aligned column tile
        tm = None
        # Largest row tile that (a) divides B_pad, (b) leaves >= 2 row tiles
        # for v7x megacore sharding, (c) fits full-D double-buffered blocks.
        for cand in (1024, 512, 256, 128):
            if (cand * 2 <= B_pad and B_pad % cand == 0 and
                    2 * (cand + tn) * D * itemsize + cand * tn * 4 <= budget):
                tm = cand
                break
        if tm is None:                  # very large D -> K-split fallback
            tm = 256
    # K handling: keep the full embedding dim if it fits (imgs stays resident
    # across column tiles), otherwise split K into 128-aligned chunks.
    if 2 * (tm + tn) * D * itemsize + tm * tn * 4 <= budget:
        return B_pad, tm, tn, D, D, 1
    tk_max = max(128, ((budget - tm * tn * 4) // (2 * (tm + tn) * itemsize)) // 128 * 128)
    num_k = max(1, _cdiv(D, tk_max))
    tk = _round_up(_cdiv(D, num_k), 128)
    D_pad = tk * num_k
    return B_pad, tm, tn, D_pad, tk, num_k


def _loss_tile_kernel(imgs_ref, caps_ref, mdrow_ref, mdcol_ref, out_ref, *scratch,
                      use_caps, use_imgs, num_k, tm, tn, valid_b, needs_mask):
    """One (tm, tn) score tile; accumulates per-row partial sums into out_ref."""
    i = pl.program_id(0)
    j = pl.program_id(1)

    def nt_dot(a, b):
        # (tm, tk) x (tn, tk) contracting the embedding dim -> (tm, tn), f32 acc.
        return jax.lax.dot_general(
            a, b, dimension_numbers=(((1,), (1,)), ((), ())),
            preferred_element_type=jnp.float32)

    def epilogue(scores):
        total = None
        if use_caps:     # cost_c: column-broadcast (margin - diag)
            total = jnp.maximum(mdcol_ref[...] + scores, 0.0)
        if use_imgs:     # cost_i: row-broadcast (margin - diag)
            cost_i = jnp.maximum(mdrow_ref[...] + scores, 0.0)
            total = cost_i if total is None else total + cost_i
        if needs_mask:   # zero contributions from zero-padded rows / cols
            rows = i * tm + jax.lax.broadcasted_iota(jnp.int32, (tm, tn), 0)
            cols = j * tn + jax.lax.broadcasted_iota(jnp.int32, (tm, tn), 1)
            total = jnp.where((rows < valid_b) & (cols < valid_b), total, 0.0)
        out_ref[...] += jnp.sum(total, axis=1, keepdims=True)

    if num_k == 1:
        @pl.when(j == 0)
        def _init_out():
            out_ref[...] = jnp.zeros_like(out_ref)

        epilogue(nt_dot(imgs_ref[...], caps_ref[...]))
    else:
        (acc_ref,) = scratch
        k = pl.program_id(2)

        @pl.when((j == 0) & (k == 0))
        def _init_out():
            out_ref[...] = jnp.zeros_like(out_ref)

        @pl.when(k == 0)
        def _init_acc():
            acc_ref[...] = jnp.zeros_like(acc_ref)

        acc_ref[...] += nt_dot(imgs_ref[...], caps_ref[...])

        @pl.when(k == num_k - 1)
        def _finish():
            epilogue(acc_ref[...])


def contrastive_loss(imgs, caps, margin=0.2, use_caps=True, use_imgs=True,
                     compute_dtype=jnp.bfloat16):
    """imgs: (B, D), caps: (B, D) -> scalar f32 loss (2-D branch of the module).

    compute_dtype=jnp.bfloat16 (default) halves HBM traffic and feeds the MXU at
    native bf16 rate with f32 accumulation; pass jnp.float32 / None to keep the
    input precision (bit-faithful to the reference).
    """
    assert imgs.ndim == 2 and imgs.shape == caps.shape, (imgs.shape, caps.shape)
    B, D = imgs.shape
    margin = float(margin)
    use_caps = bool(use_caps)
    use_imgs = bool(use_imgs)
    if not (use_caps or use_imgs):
        return jnp.zeros((), jnp.float32)

    cdtype = imgs.dtype if compute_dtype is None else jnp.dtype(compute_dtype)
    imgs_c = imgs.astype(cdtype)
    caps_c = caps.astype(cdtype)

    B_pad, tm, tn, D_pad, tk, num_k = _choose_tiling(B, D, cdtype.itemsize)

    # (margin - diag) in one fused XLA pass: O(B*D), a single HBM read of each
    # operand; a dedicated pallas_call launch is not worth it (review item 10).
    diag = jnp.sum(imgs_c.astype(jnp.float32) * caps_c.astype(jnp.float32), axis=-1)
    mdiag = jnp.float32(margin) - diag
    if B_pad != B:
        mdiag = jnp.pad(mdiag, (0, B_pad - B))
    mdiag_row = mdiag.reshape(B_pad, 1)
    mdiag_col = mdiag.reshape(1, B_pad)

    if B_pad != B or D_pad != D:
        pad = ((0, B_pad - B), (0, D_pad - D))
        imgs_c = jnp.pad(imgs_c, pad)   # zero rows/cols: masked in the kernel
        caps_c = jnp.pad(caps_c, pad)

    nI, nJ = B_pad // tm, B_pad // tn

    kernel = functools.partial(
        _loss_tile_kernel, use_caps=use_caps, use_imgs=use_imgs, num_k=num_k,
        tm=tm, tn=tn, valid_b=B, needs_mask=(B_pad != B))

    row_sums = pl.pallas_call(
        kernel,
        out_shape=jax.ShapeDtypeStruct((B_pad, 1), jnp.float32),
        grid=(nI, nJ, num_k),
        in_specs=[
            pl.BlockSpec((tm, tk), lambda i, j, k: (i, k)),   # imgs row tile
            pl.BlockSpec((tn, tk), lambda i, j, k: (j, k)),   # caps col tile
            pl.BlockSpec((tm, 1), lambda i, j, k: (i, 0)),    # margin - diag (rows)
            pl.BlockSpec((1, tn), lambda i, j, k: (0, j)),    # margin - diag (cols)
        ],
        out_specs=pl.BlockSpec((tm, 1), lambda i, j, k: (i, 0)),
        scratch_shapes=([pltpu.VMEM((tm, tn), jnp.float32)] if num_k > 1 else []),
        compiler_params=pltpu.CompilerParams(
            dimension_semantics=("parallel", "arbitrary", "arbitrary"),
            vmem_limit_bytes=_VMEM_LIMIT_BYTES),
    )(imgs_c, caps_c, mdiag_row, mdiag_col)

    # Every (valid) diagonal entry of every enabled term equals relu(margin)
    # (scores[i, i] == diag[i] up to accumulation-order epsilon); the module
    # zeroes them before the mean, so subtract analytically instead of masking.
    n_terms = int(use_caps) + int(use_imgs)
    corr = jnp.float32(n_terms * B * max(margin, 0.0))
    return (jnp.sum(row_sums) - corr) / jnp.float32(B * B)


def _reference_loss(imgs, caps, margin=0.2, use_caps=True, use_imgs=True):
    scores = imgs @ caps.T
    diag = jnp.diagonal(scores)
    cost_c = jnp.maximum(margin - diag[None, :] + scores, 0.0)
    cost_i = jnp.maximum(margin - diag[:, None] + scores, 0.0)
    cost_c = cost_c - jnp.diag(jnp.diagonal(cost_c))
    cost_i = cost_i - jnp.diag(jnp.diagonal(cost_i))
    cost = 0.0
    if use_caps:
        cost = cost + jnp.mean(cost_c)
    if use_imgs:
        cost = cost + jnp.mean(cost_i)
    return cost


def _make_inputs(key, B, D):
    k1, k2 = jax.random.split(key)
    imgs = jax.random.normal(k1, (B, D), dtype=jnp.float32)
    caps = jax.random.normal(k2, (B, D), dtype=jnp.float32)
    imgs = imgs / jnp.linalg.norm(imgs, axis=-1, keepdims=True)
    caps = caps / jnp.linalg.norm(caps, axis=-1, keepdims=True)
    return imgs, caps


if __name__ == "__main__":
    key = jax.random.PRNGKey(0)

    # Primary small example: B=8, D=32.
    imgs, caps = _make_inputs(key, 8, 32)

    # Exact f32 compute path, each flag combination individually (validates the
    # use_caps<->cost_c / use_imgs<->cost_i mapping, per the review).
    for uc, ui in [(True, True), (True, False), (False, True)]:
        got = jax.block_until_ready(contrastive_loss(
            imgs, caps, margin=0.2, use_caps=uc, use_imgs=ui,
            compute_dtype=jnp.float32))
        ref = _reference_loss(imgs, caps, margin=0.2, use_caps=uc, use_imgs=ui)
        assert jnp.allclose(got, ref, atol=1e-5, rtol=1e-5), (uc, ui, got, ref)

    # Default bf16 compute path (halved HBM traffic) -> looser tolerance.
    got_bf16 = jax.block_until_ready(contrastive_loss(imgs, caps, margin=0.2))
    ref = _reference_loss(imgs, caps, margin=0.2)
    assert jnp.allclose(got_bf16, ref, atol=2e-2, rtol=2e-2), (got_bf16, ref)

    # Odd batch / feature sizes exercise the zero-pad + mask path.
    imgs2, caps2 = _make_inputs(jax.random.fold_in(key, 1), 13, 40)
    got = jax.block_until_ready(contrastive_loss(
        imgs2, caps2, margin=0.2, compute_dtype=jnp.float32))
    ref = _reference_loss(imgs2, caps2, margin=0.2)
    assert jnp.allclose(got, ref, atol=1e-5, rtol=1e-5), (got, ref)

    # Multi-tile case (B > 256): exercises the accumulating j axis, the padded
    # batch mask, and the "parallel" row-tile axis (nI = 2).
    imgs3, caps3 = _make_inputs(jax.random.fold_in(key, 2), 320, 48)
    got = jax.block_until_ready(contrastive_loss(
        imgs3, caps3, margin=0.2, compute_dtype=jnp.float32))
    ref = _reference_loss(imgs3, caps3, margin=0.2)
    assert jnp.allclose(got, ref, atol=1e-5, rtol=1e-5), (got, ref)

    print("KERNEL_OK")
</pallas_src>

<mosaic_0001>
module attributes {stable_mosaic.version = 11 : i64} {
  func.func @_loss_tile_kernel(%arg0: i32, %arg1: i32, %arg2: i32, %arg3: memref<8x32xf32, #tpu.memory_space<vmem>>, %arg4: memref<8x32xf32, #tpu.memory_space<vmem>>, %arg5: memref<8x1xf32, #tpu.memory_space<vmem>>, %arg6: memref<1x8xf32, #tpu.memory_space<vmem>>, %arg7: memref<8x1xf32, #tpu.memory_space<vmem>>) attributes {dimension_semantics = [#tpu.dimension_semantics<parallel>, #tpu.dimension_semantics<arbitrary>, #tpu.dimension_semantics<arbitrary>], iteration_bounds = array<i64: 1, 1, 1>, scalar_prefetch = 0 : i64, scratch_operands = 0 : i64, tpu.core_type = #tpu.core_type<tc>, window_params = [{transform_indices = @transform_0, window_bounds = array<i64: 8, 32>}, {transform_indices = @transform_1, window_bounds = array<i64: 8, 32>}, {transform_indices = @transform_2, window_bounds = array<i64: 8, 1>}, {transform_indices = @transform_3, window_bounds = array<i64: 1, 8>}, {transform_indices = @transform_4, window_bounds = array<i64: 8, 1>}]} {
    %c0_i32 = arith.constant 0 : i32
    %0 = arith.cmpi eq, %arg1, %c0_i32 : i32
    %1 = arith.extui %0 : i1 to i32
    %c0_i32_0 = arith.constant 0 : i32
    %2 = arith.cmpi ne, %1, %c0_i32_0 : i32
    scf.if %2 {
      %cst_15 = arith.constant 0.000000e+00 : f32
      %22 = vector.broadcast %cst_15 : f32 to vector<8x1xf32>
      %c0_16 = arith.constant 0 : index
      %c0_17 = arith.constant 0 : index
      %23 = vector.load %arg7[%c0_16, %c0_17] : memref<8x1xf32, #tpu.memory_space<vmem>>, vector<8x1xf32>
      tpu.vector_store %arg7[%c0_16, %c0_17], %22 {strides = array<i32>} : memref<8x1xf32, #tpu.memory_space<vmem>>, vector<8x1xf32>,
    } else {
    }
    %c0 = arith.constant 0 : index
    %c0_1 = arith.constant 0 : index
    %3 = vector.load %arg3[%c0, %c0_1] : memref<8x32xf32, #tpu.memory_space<vmem>>, vector<8x32xf32>
    %c0_2 = arith.constant 0 : index
    %c0_3 = arith.constant 0 : index
    %4 = vector.load %arg4[%c0_2, %c0_3] : memref<8x32xf32, #tpu.memory_space<vmem>>, vector<8x32xf32>
    %cst = arith.constant dense<0.000000e+00> : vector<8x8xf32>
    %5 = tpu.matmul %3, %4, %cst {dimension_numbers = #tpu.dot_dimension_numbers<[1], [1], [0], [0], [0, 0, 1, 0], [], []>} : vector<8x32xf32>, vector<8x32xf32>, vector<8x8xf32> -> vector<8x8xf32>
    %c0_4 = arith.constant 0 : index
    %c0_5 = arith.constant 0 : index
    %6 = vector.load %arg6[%c0_4, %c0_5] : memref<1x8xf32, #tpu.memory_space<vmem>>, vector<1x8xf32>
    %7 = vector.broadcast %6 : vector<1x8xf32> to vector<8x8xf32>
    %8 = arith.addf %7, %5 : vector<8x8xf32>
    %cst_6 = arith.constant 0.000000e+00 : f32
    %9 = vector.broadcast %cst_6 : f32 to vector<8x8xf32>
    %10 = arith.maximumf %8, %9 : vector<8x8xf32>
    %c0_7 = arith.constant 0 : index
    %c0_8 = arith.constant 0 : index
    %11 = vector.load %arg5[%c0_7, %c0_8] : memref<8x1xf32, #tpu.memory_space<vmem>>, vector<8x1xf32>
    %12 = vector.broadcast %11 : vector<8x1xf32> to vector<8x8xf32>
    %13 = arith.addf %12, %5 : vector<8x8xf32>
    %cst_9 = arith.constant 0.000000e+00 : f32
    %14 = vector.broadcast %cst_9 : f32 to vector<8x8xf32>
    %15 = arith.maximumf %13, %14 : vector<8x8xf32>
    %16 = arith.addf %10, %15 : vector<8x8xf32>
    %c0_10 = arith.constant 0 : index
    %c0_11 = arith.constant 0 : index
    %17 = vector.load %arg7[%c0_10, %c0_11] : memref<8x1xf32, #tpu.memory_space<vmem>>, vector<8x1xf32>
    %cst_12 = arith.constant dense<0.000000e+00> : vector<8xf32>
    %18 = vector.multi_reduction <add>, %16, %cst_12 [1] : vector<8x8xf32> to vector<8xf32>
    %19 = vector.shape_cast %18 : vector<8xf32> to vector<8x1xf32>
    %20 = arith.addf %17, %19 : vector<8x1xf32>
    %c0_13 = arith.constant 0 : index
    %c0_14 = arith.constant 0 : index
    %21 = vector.load %arg7[%c0_13, %c0_14] : memref<8x1xf32, #tpu.memory_space<vmem>>, vector<8x1xf32>
    tpu.vector_store %arg7[%c0_13, %c0_14], %20 {strides = array<i32>} : memref<8x1xf32, #tpu.memory_space<vmem>>, vector<8x1xf32>,
    return
  }
  func.func @transform_0(%arg0: i32, %arg1: i32, %arg2: i32) -> (i32, i32) {
    %c0_i32 = arith.constant 0 : i32
    return %arg0, %arg2 : i32, i32
  }
  func.func @transform_1(%arg0: i32, %arg1: i32, %arg2: i32) -> (i32, i32) {
    %c0_i32 = arith.constant 0 : i32
    return %arg1, %arg2 : i32, i32
  }
  func.func @transform_2(%arg0: i32, %arg1: i32, %arg2: i32) -> (i32, i32) {
    %c0_i32 = arith.constant 0 : i32
    %c0_i32_0 = arith.constant 0 : i32
    return %arg0, %c0_i32 : i32, i32
  }
  func.func @transform_3(%arg0: i32, %arg1: i32, %arg2: i32) -> (i32, i32) {
    %c0_i32 = arith.constant 0 : i32
    %c0_i32_0 = arith.constant 0 : i32
    return %c0_i32, %arg1 : i32, i32
  }
  func.func @transform_4(%arg0: i32, %arg1: i32, %arg2: i32) -> (i32, i32) {
    %c0_i32 = arith.constant 0 : i32
    %c0_i32_0 = arith.constant 0 : i32
    return %arg0, %c0_i32 : i32, i32
  }
}

</mosaic_0001>

<llo_original>
// kernel: tpu_custom_call.1
$region0: #{tpu_custom_call.1}
  #allocation0 [shape = 'u32[]', space=smem, size = 0x4, offset = 0x4, fixed_abs, tag = 'smem constant byte address 0x4 - core index']
  #allocation1 [shape = 'u32[144,128]{1,0:T(1,128)}', space=vmem, size = 0x12000, scoped, tag = 'internal scratch']
  %s0 = inlined_call_operand.vmem [shape: f32[8,32], index: 0, kind: input, shape index: {}]
  %s1 = inlined_call_operand.hbm [shape: f32[8,32], index: 1, kind: input, shape index: {}]
  %s2 = inlined_call_operand.vmem [shape: f32[8,1], index: 2, kind: input, shape index: {}]
  %s3 = inlined_call_operand.vmem [shape: f32[1,8], index: 3, kind: input, shape index: {}]
  %s4 = inlined_call_operand.vmem [shape: f32[8,1], index: 4, kind: output, shape index: {}]
  %s5 = sld [smem:[#allocation0]]
  $region34: #{tpu_custom_call.1} parent=0
    _
  %s7 = ssub.s32 1, %s5
  %s8 = scalar_select 0, %s7, %s5
  $region1: #{tpu_custom_call.1} parent=0
    #allocation2 [shape = 'u8[4096]{0}', space=vmem, size = 0x1000, scoped, tag = 'input window, operand 1, single buffered']
    #allocation3 [shape = 's32[1]{0}', space=sflag, size = 0x4, scoped, tag = 'scoped memory for tpu_custom_call.1']
    %9 = vsyncpa [#allocation3], 0
    // Predicated region
    $region2: #{tpu_custom_call.1} parent=1 // pred_check
      _
    $region3: #{tpu_custom_call.1} parent=1 // pred_check_branch
      %11 = sbr.rel (0) target = $region5
    $region4: #{tpu_custom_call.1} parent=1 // pred_region
      _
    $region5: #{tpu_custom_call.1} parent=1 // pred_fallthru
      _
    // Predicated region
    $region6: #{tpu_custom_call.1} parent=1 // pred_check
      _
    $region7: #{tpu_custom_call.1} parent=1 // pred_check_branch
      %13 = sbr.rel (0) target = $region9
    $region8: #{tpu_custom_call.1} parent=1 // pred_region
      %s15 = ssub.s32 128, 128
      %16 = vsyncadd [#allocation3], %s15
      %s18 = sshll.u32 [#allocation2], 4
      %s19 = int_to_ptr.vmem [resolvable:$true] %s18
      %21 = dma.hbm_to_vmem [thread:$0]  %s1, 128, %s19, [#allocation3]
    $region9: #{tpu_custom_call.1} parent=1 // pred_fallthru
      _
    // Predicated region
    $region10: #{tpu_custom_call.1} parent=1 // pred_check
      _
    $region11: #{tpu_custom_call.1} parent=1 // pred_check_branch
      %23 = sbr.rel (0) target = $region13
    $region12: #{tpu_custom_call.1} parent=1 // pred_region
      _
    $region13: #{tpu_custom_call.1} parent=1 // pred_fallthru
      _
    // Predicated region
    $region14: #{tpu_custom_call.1} parent=1 // pred_check
      _
    $region15: #{tpu_custom_call.1} parent=1 // pred_check_branch
      %25 = sbr.rel (0) target = $region17
    $region16: #{tpu_custom_call.1} parent=1 // pred_region
      _
    $region17: #{tpu_custom_call.1} parent=1 // pred_fallthru
      _
    // Predicated region
    $region18: #{tpu_custom_call.1} parent=1 // pred_check
      _
    $region19: #{tpu_custom_call.1} parent=1 // pred_check_branch
      %27 = sbr.rel (0) target = $region21
    $region20: #{tpu_custom_call.1} parent=1 // pred_region
      %28 = dma.done [#allocation3], 128
    $region21: #{tpu_custom_call.1} parent=1 // pred_fallthru
      _
    %p29 = scmp.eq.s32.totalorder 0, 0
    // Predicated region
    $region22: #{tpu_custom_call.1} parent=1 // pred_check
      %p30 = pneg %p29
    $region23: #{tpu_custom_call.1} parent=1 // pred_check_branch
      %32 = sbr.rel (%p30) target = $region25
    $region24: #{tpu_custom_call.1} parent=1 // pred_region
      %vm33 = vcmask 7168
      %34 = vst.msk [vmem:[%s4] sm:$0xff] %vm33, 0.0
    $region25: #{tpu_custom_call.1} parent=1 // pred_fallthru
      _
    %v35 = vld [vmem:[%s0] sm:$0xff]
    %v36 = vld [vmem:[#allocation2] sm:$0xff]
    %vm37 = vcmask 261120
    %v39 = vsel %vm37, %v35, 0
    %v42 = vsel %vm37, %v36, 0
    %44 = vmatprep.subr.mxu0 0.0
    %45 = vmatpush1.xpose.msra.mxu0 %v42
    %46 = vmatprep.subr.mxu0 0.0
    %47 = vmatpush1.xpose.msra.mxu0 0.0
    %48 = vmatprep.subr.mxu0 0.0
    %49 = vmatpush1.xpose.msra.mxu0 0.0
    %50 = vmatprep.subr.mxu0 0.0
    %51 = vmatpush1.xpose.msra.mxu0 0.0
    %52 = vmatprep.subr.mxu0 0.0
    %53 = vmatpush1.xpose.msra.mxu0 0.0
    %54 = vmatprep.subr.mxu0 0.0
    %55 = vmatpush1.xpose.msra.mxu0 0.0
    %56 = vmatprep.subr.mxu0 0.0
    %57 = vmatpush1.xpose.msra.mxu0 0.0
    %58 = vmatprep.subr.mxu0 0.0
    %59 = vmatpush1.xpose.msra.mxu0 0.0
    %60 = vmatprep.subr.mxu0 0.0
    %61 = vmatpush1.xpose.msra.mxu0 0.0
    %62 = vmatprep.subr.mxu0 0.0
    %63 = vmatpush1.xpose.msra.mxu0 0.0
    %64 = vmatprep.subr.mxu0 0.0
    %65 = vmatpush1.xpose.msra.mxu0 0.0
    %66 = vmatprep.subr.mxu0 0.0
    %67 = vmatpush1.xpose.msra.mxu0 0.0
    %68 = vmatprep.subr.mxu0 0.0
    %69 = vmatpush1.xpose.msra.mxu0 0.0
    %70 = vmatprep.subr.mxu0 0.0
    %71 = vmatpush1.xpose.msra.mxu0 0.0
    %72 = vmatprep.subr.mxu0 0.0
    %73 = vmatpush1.xpose.msra.mxu0 0.0
    %74 = vmatprep.subr.mxu0 0.0
    %75 = vmatpush1.xpose.msra.mxu0 0.0
    %76 = vmatprep.subr.mxu0 0.0
    %77 = vmatpush1.xpose.msra.mxu0 0.0
    %78 = vmatprep.subr.mxu0 0.0
    %79 = vmatpush1.xpose.msra.mxu0 0.0
    %80 = vmatprep.subr.mxu0 0.0
    %81 = vmatpush1.xpose.msra.mxu0 0.0
    %82 = vmatprep.subr.mxu0 0.0
    %83 = vmatpush1.xpose.msra.mxu0 0.0
    %84 = vmatprep.subr.mxu0 0.0
    %85 = vmatpush1.xpose.msra.mxu0 0.0
    %86 = vmatprep.subr.mxu0 0.0
    %87 = vmatpush1.xpose.msra.mxu0 0.0
    %88 = vmatprep.subr.mxu0 0.0
    %89 = vmatpush1.xpose.msra.mxu0 0.0
    %90 = vmatprep.subr.mxu0 0.0
    %91 = vmatpush1.xpose.msra.mxu0 0.0
    %92 = vmatprep.subr.mxu0 0.0
    %93 = vmatpush1.xpose.msra.mxu0 0.0
    %94 = vmatprep.subr.mxu0 0.0
    %95 = vmatpush1.xpose.msra.mxu0 0.0
    %96 = vmatprep.subr.mxu0 0.0
    %97 = vmatpush1.xpose.msra.mxu0 0.0
    %98 = vmatprep.subr.mxu0 0.0
    %99 = vmatpush1.xpose.msra.mxu0 0.0
    %100 = vmatprep.subr.mxu0 0.0
    %101 = vmatpush1.xpose.msra.mxu0 0.0
    %102 = vmatprep.subr.mxu0 0.0
    %103 = vmatpush1.xpose.msra.mxu0 0.0
    %104 = vmatprep.subr.mxu0 0.0
    %105 = vmatpush1.xpose.msra.mxu0 0.0
    %106 = vmatprep.subr.mxu0 0.0
    %107 = vmatpush1.xpose.msra.mxu0 0.0
    %108 = vmatprep.mubr.f32.mxu0 0.0
    %109 = vmatmul.mubr.f32.gmra.mrb[0].mxu0 %v39
    %v110 = vpop.f32.mrb[0].mxu0
    %v111 = vadd.f32 0.0, %v110
    %v112 = vpop.f32.mrb[0].mxu0
    %113 = vdwg.mxu0
    %v114 = vld [vmem:[%s3] sm:$0x1]
    %v116 = vlaneseq
    %v117 = vshrl.u32 %v116, 7
    %v118 = vsub.s32 0, %v117
    %v119 = vrot.slane %v114, %v118
    %v121 = vadd.f32 %v119, %v111
    %v122 = vmax.f32 %v121, 0.0
    %v123 = vld [vmem:[%s2] sm:$0xff]
    %125 = vset.pattern.permute.xlu0 0
    %126 = vperm.xlu0 %125, %v123
    %v127 = vpop.permute.xlu0 %126
    %v129 = vadd.f32 %v127, %v111
    %v130 = vmax.f32 %v129, 0.0
    %v131 = vadd.f32 %v122, %v130
    %v132 = vld [vmem:[%s4] sm:$0xff]
    %vm133 = vcmask 64512
    %v134 = vsel %vm133, %v131, 0.0
    %135 = vadd.xlane.f32.xlu0 %v134
    %v136 = vpop.xlane.xlu0 %135
    %v137 = vadd.f32 %v132, %v136
    %vm138 = vcmask 7168
    %139 = vst.msk [vmem:[%s4] sm:$0xff] %vm138, %v137
    // Predicated region
    $region26: #{tpu_custom_call.1} parent=1 // pred_check
      _
    $region27: #{tpu_custom_call.1} parent=1 // pred_check_branch
      %141 = sbr.rel (0) target = $region29
    $region28: #{tpu_custom_call.1} parent=1 // pred_region
      _
    $region29: #{tpu_custom_call.1} parent=1 // pred_fallthru
      _
    // Predicated region
    $region30: #{tpu_custom_call.1} parent=1 // pred_check
      _
    $region31: #{tpu_custom_call.1} parent=1 // pred_check_branch
      %143 = sbr.rel (0) target = $region33
    $region32: #{tpu_custom_call.1} parent=1 // pred_region
      _
    $region33: #{tpu_custom_call.1} parent=1 // pred_fallthru
      _
    %144 = vsyncpa [#allocation3], 1

</llo_original>
